<compile_context>
chip_gen: v6e
topology: v6e:2x2x1
jax: 0.10.0
libtpu: 0.0.40
codegen_flags: <defaults>
</compile_context>

<pallas_src>
import numpy as np
import jax
import jax.numpy as jnp
from jax import lax
from jax.experimental import pallas as pl
from jax.experimental.pallas import tpu as pltpu

# box order: inner_cube, indent_cube1..6, ext_cube1, ext_cube2,
#            ext_indent_cube1..6, ring_cube1, ring_cube2
_NUM_BOXES = 17


def _make_kernel(sph_center, sph_radii, box_centers, box_halves):
    """Builds a kernel with all SDF parameters baked in as constants."""
    cx, cy, cz = sph_center
    r_in1, r_in2, r_ring1, r_ring2 = sph_radii

    def kernel(pts_ref, out_ref):
        # pts_ref : VMEM (3, TM, 128) f32   x / y / z coordinate planes
        # out_ref : VMEM (TM, 128)    f32   signed distance per point
        x = pts_ref[0]
        y = pts_ref[1]
        z = pts_ref[2]

        # Shared-center deltas: reused by all 4 spheres and by every box axis
        # whose center coincides with the inner center.
        dx = x - cx
        dy = y - cy
        dz = z - cz
        abs_d = (jnp.abs(dx), jnp.abs(dy), jnp.abs(dz))
        coords = (x, y, z)
        ctr = (cx, cy, cz)

        def safe_norm(ssq):
            # ssq * rsqrt(ssq): the norm goes through the EUP rsqrt slot
            # instead of a VALU sqrt sequence; guard ssq == 0 (point inside a
            # box "core" / at the sphere center) against 0 * inf = NaN.
            return jnp.where(ssq > 0.0, ssq * lax.rsqrt(ssq), 0.0)

        dist_c = safe_norm(dx * dx + dy * dy + dz * dz)

        # Memoized per-axis box terms: (b, relu(b)^2) keyed on the exact
        # (axis, center, half-extent) constants, so identical sub-expressions
        # shared across boxes are computed once (compile-time CSE by hand).
        cache = {}

        def axis_term(axis, c, h):
            key = (axis, c, h)
            t = cache.get(key)
            if t is None:
                if c == ctr[axis]:
                    b = abs_d[axis] - h          # reuse |coord - inner_center|
                else:
                    b = jnp.abs(coords[axis] - c) - h
                p = jnp.maximum(b, 0.0)
                t = (b, p * p)
                cache[key] = t
            return t

        def box_sd(i):
            bc, bh = box_centers[i], box_halves[i]
            bx, sx = axis_term(0, bc[0], bh[0])
            by, sy = axis_term(1, bc[1], bh[1])
            bz, sz = axis_term(2, bc[2], bh[2])
            outside = safe_norm(sx + sy + sz)
            inside = jnp.minimum(jnp.maximum(jnp.maximum(bx, by), bz), 0.0)
            return outside + inside

        # ---- CSG combination (exactly matches the torch forward; max/min
        # folds are associative & commutative so accumulate-as-you-go is
        # bit-exact).  Each box is folded immediately so only a handful of
        # full-tile intermediates are live at any point. ----

        # ring = max(ring_sphere1, -ring_sphere2 - ring_cube1, -ring_cube2)
        ring = jnp.maximum(
            dist_c - r_ring1,
            jnp.maximum(-(dist_c - r_ring2) - box_sd(15), -box_sd(16)))

        # d = max(ext1, -ext2, -ext_indent1..6)
        d = jnp.maximum(box_sd(7), -box_sd(8))
        for i in range(9, 15):
            d = jnp.maximum(d, -box_sd(i))

        d = jnp.minimum(ring, d)
        d = jnp.minimum(d, dist_c - r_in1)       # min with inner_sphere1
        d = jnp.maximum(d, -(dist_c - r_in2))    # max with -inner_sphere2
        for i in range(1, 7):                    # max with -indent_cube1..6
            d = jnp.maximum(d, -box_sd(i))
        d = jnp.minimum(d, box_sd(0))            # min with inner_cube

        out_ref[...] = d

    return kernel


def marvel_cube_sdf(points, sph_center, sph_radii, box_centers, box_sides,
                    *, tile_rows=1024):
    """points: (..., 3); parameters are trace-time constants -> (N, 1) f32."""
    sph_center_t = tuple(float(v) for v in np.asarray(sph_center, np.float32))
    sph_radii_t = tuple(float(v) for v in np.asarray(sph_radii, np.float32))
    bc = np.asarray(box_centers, np.float32)
    bh = np.asarray(box_sides, np.float32) / 2.0
    box_centers_t = tuple(tuple(float(v) for v in row) for row in bc)
    box_halves_t = tuple(tuple(float(v) for v in row) for row in bh)

    pts = jnp.reshape(points, (-1, 3)).astype(jnp.float32)      # (N, 3)
    n = pts.shape[0]
    rows = pl.cdiv(n, 128)

    # Round to a sublane multiple (user-passed 500 etc. would be illegal) and
    # cap the tile so the grid has >= ~4 steps on realistic inputs -- keeps
    # both v7x TensorCores busy via the "parallel" grid axis.
    tile_rows = max(8, (int(tile_rows) // 8) * 8)
    tm_cap = max(8, (((rows + 3) // 4) + 7) // 8 * 8)
    tm = min(tile_rows, tm_cap)
    rows_pad = pl.cdiv(rows, tm) * tm
    n_pad = rows_pad * 128

    # Coordinate-major, lane-dense planar layout (3, rows_pad, 128).
    # TODO(synk): if the producer can emit points coordinate-major directly
    # (or allow_input_fusion proves safe here), this transpose + pad copy
    # disappears from the end-to-end HBM traffic.
    pts_t = jnp.transpose(pts)                                   # (3, N)
    if n_pad != n:
        pts_t = jnp.pad(pts_t, ((0, 0), (0, n_pad - n)))
    pts_planar = jnp.reshape(pts_t, (3, rows_pad, 128))

    kernel = _make_kernel(sph_center_t, sph_radii_t,
                          box_centers_t, box_halves_t)

    out = pl.pallas_call(
        kernel,
        out_shape=jax.ShapeDtypeStruct((rows_pad, 128), jnp.float32),
        grid_spec=pltpu.PrefetchScalarGridSpec(
            num_scalar_prefetch=0,
            grid=(rows_pad // tm,),
            in_specs=[pl.BlockSpec((3, tm, 128), lambda i: (0, i, 0))],
            out_specs=pl.BlockSpec((tm, 128), lambda i: (i, 0)),
        ),
        compiler_params=pltpu.CompilerParams(
            dimension_semantics=("parallel",)),
    )(pts_planar)

    return jnp.reshape(out, (n_pad, 1))[:n]                      # (N, 1)


# ----------------------------- pure-JAX reference -----------------------------

def _sphere_ref(pts, center, radius):
    return jnp.linalg.norm(pts - center[None, :], axis=-1, keepdims=True) - radius


def _box_ref(pts, center, side):
    diff = jnp.abs(pts - center[None, :]) - side[None, :] / 2.0
    sd = (jnp.linalg.norm(jnp.maximum(diff, 0.0), axis=-1)
          + jnp.minimum(jnp.max(diff, axis=-1), 0.0))
    return sd[:, None]


def marvel_cube_sdf_ref(points, sph_center, sph_radii, box_centers, box_sides):
    pts = jnp.reshape(points, (-1, 3)).astype(jnp.float32)
    s1 = _sphere_ref(pts, sph_center, sph_radii[0])
    s2 = _sphere_ref(pts, sph_center, sph_radii[1])
    rs1 = _sphere_ref(pts, sph_center, sph_radii[2])
    rs2 = _sphere_ref(pts, sph_center, sph_radii[3])
    b = [_box_ref(pts, box_centers[i], box_sides[i]) for i in range(_NUM_BOXES)]
    inner_cube, ind, ext1, ext2 = b[0], b[1:7], b[7], b[8]
    eind, rc1, rc2 = b[9:15], b[15], b[16]

    ring = jnp.max(jnp.hstack([rs1, -rs2 - rc1, -rc2]), axis=-1, keepdims=True)
    d = jnp.max(jnp.hstack([ext1, -ext2] + [-e for e in eind]),
                axis=-1, keepdims=True)
    d = jnp.minimum(ring, d)
    d = jnp.minimum(d, s1)
    d = jnp.max(jnp.hstack([d, -s2] + [-i for i in ind]), axis=-1, keepdims=True)
    d = jnp.minimum(d, inner_cube)
    return d


if __name__ == "__main__":
    key = jax.random.PRNGKey(0)

    # Deterministic "module parameters" (cfg values + offset, mirroring
    # MarvelCubeSDF.__init__; every center below already includes the offset).
    offset = jnp.array([0.05, -0.10, 0.15], dtype=jnp.float32)
    inner_center = jnp.array([0.0, 0.0, 0.0], dtype=jnp.float32) + offset

    sph_center = inner_center
    # [inner_radius1, inner_radius2, ring_sphere_radius1, ring_sphere_radius2]
    sph_radii = jnp.array([0.60, 0.55, 0.95, 0.90], dtype=jnp.float32)

    def c(v):
        return jnp.array(v, dtype=jnp.float32) + offset

    box_centers = jnp.stack([
        inner_center,                                 # inner_cube
        c([0.45, 0.0, 0.0]), c([-0.45, 0.0, 0.0]),    # indent_cube1..2
        c([0.0, 0.45, 0.0]), c([0.0, -0.45, 0.0]),    # indent_cube3..4
        c([0.0, 0.0, 0.45]), c([0.0, 0.0, -0.45]),    # indent_cube5..6
        inner_center,                                 # ext_cube1
        inner_center,                                 # ext_cube2
        c([0.70, 0.0, 0.0]), c([-0.70, 0.0, 0.0]),    # ext_indent_cube1..2
        c([0.0, 0.70, 0.0]), c([0.0, -0.70, 0.0]),    # ext_indent_cube3..4
        c([0.0, 0.0, 0.70]), c([0.0, 0.0, -0.70]),    # ext_indent_cube5..6
        c([0.0, 0.0, 0.30]), c([0.0, 0.0, -0.30]),    # ring_cube1..2
    ])                                                # (17, 3)

    ext_indent_side = [0.50, 0.50, 0.50]
    ring_cube_side = [2.00, 2.00, 0.40]
    box_sides = jnp.array([
        [0.90, 0.90, 0.90],                           # inner_side
        [0.30, 0.35, 0.35], [0.30, 0.35, 0.35],       # indent_side1..2
        [0.35, 0.30, 0.35], [0.35, 0.30, 0.35],       # indent_side3..4
        [0.35, 0.35, 0.30], [0.35, 0.35, 0.30],       # indent_side5..6
        [1.40, 1.40, 1.40],                           # ext_side1
        [1.20, 1.20, 1.20],                           # ext_side2
        ext_indent_side, ext_indent_side,
        ext_indent_side, ext_indent_side,
        ext_indent_side, ext_indent_side,
        ring_cube_side, ring_cube_side,
    ], dtype=jnp.float32)                             # (17, 3)

    # Test 1: small point cloud, batch=2, 256 points each -> N = 512.
    points = jax.random.uniform(key, (2, 256, 3), dtype=jnp.float32,
                                minval=-1.5, maxval=1.5)
    out = marvel_cube_sdf(points, sph_center, sph_radii, box_centers, box_sides)
    out = jax.block_until_ready(out)
    ref = marvel_cube_sdf_ref(points, sph_center, sph_radii,
                              box_centers, box_sides)
    assert out.shape == (512, 1), out.shape
    assert jnp.allclose(out, ref, atol=2e-5, rtol=2e-5), \
        float(jnp.max(jnp.abs(out - ref)))

    # Test 2: non-multiple-of-128 point count -> exercises padding and a
    # multi-step grid (grid=(3,), tm=8).
    key2 = jax.random.PRNGKey(1)
    points2 = jax.random.uniform(key2, (4, 529, 3), dtype=jnp.float32,
                                 minval=-1.5, maxval=1.5)
    out2 = marvel_cube_sdf(points2, sph_center, sph_radii,
                           box_centers, box_sides)
    out2 = jax.block_until_ready(out2)
    ref2 = marvel_cube_sdf_ref(points2, sph_center, sph_radii,
                               box_centers, box_sides)
    assert out2.shape == (4 * 529, 1), out2.shape
    assert jnp.allclose(out2, ref2, atol=2e-5, rtol=2e-5), \
        float(jnp.max(jnp.abs(out2 - ref2)))

    print("KERNEL_OK")
</pallas_src>

<mosaic_0001>
module attributes {stable_mosaic.version = 11 : i64} {
  func.func @kernel(%arg0: i32, %arg1: memref<3x8x128xf32, #tpu.memory_space<vmem>>, %arg2: memref<8x128xf32, #tpu.memory_space<vmem>>) attributes {dimension_semantics = [#tpu.dimension_semantics<parallel>], iteration_bounds = array<i64: 1>, scalar_prefetch = 0 : i64, scratch_operands = 0 : i64, tpu.core_type = #tpu.core_type<tc>, window_params = [{transform_indices = @transform_0, window_bounds = array<i64: 3, 8, 128>}, {transform_indices = @transform_1, window_bounds = array<i64: 8, 128>}]} {
    %c0 = arith.constant 0 : index
    %c0_0 = arith.constant 0 : index
    %c0_1 = arith.constant 0 : index
    %0 = vector.load %arg1[%c0, %c0_0, %c0_1] : memref<3x8x128xf32, #tpu.memory_space<vmem>>, vector<1x8x128xf32>
    %1 = vector.shape_cast %0 : vector<1x8x128xf32> to vector<8x128xf32>
    %c1 = arith.constant 1 : index
    %c0_2 = arith.constant 0 : index
    %c0_3 = arith.constant 0 : index
    %2 = vector.load %arg1[%c1, %c0_2, %c0_3] : memref<3x8x128xf32, #tpu.memory_space<vmem>>, vector<1x8x128xf32>
    %3 = vector.shape_cast %2 : vector<1x8x128xf32> to vector<8x128xf32>
    %c2 = arith.constant 2 : index
    %c0_4 = arith.constant 0 : index
    %c0_5 = arith.constant 0 : index
    %4 = vector.load %arg1[%c2, %c0_4, %c0_5] : memref<3x8x128xf32, #tpu.memory_space<vmem>>, vector<1x8x128xf32>
    %5 = vector.shape_cast %4 : vector<1x8x128xf32> to vector<8x128xf32>
    %cst = arith.constant 5.000000e-02 : f32
    %6 = vector.broadcast %cst : f32 to vector<8x128xf32>
    %7 = arith.subf %1, %6 : vector<8x128xf32>
    %cst_6 = arith.constant -1.000000e-01 : f32
    %8 = vector.broadcast %cst_6 : f32 to vector<8x128xf32>
    %9 = arith.subf %3, %8 : vector<8x128xf32>
    %cst_7 = arith.constant 1.500000e-01 : f32
    %10 = vector.broadcast %cst_7 : f32 to vector<8x128xf32>
    %11 = arith.subf %5, %10 : vector<8x128xf32>
    %12 = math.absf %7 : vector<8x128xf32>
    %13 = math.absf %9 : vector<8x128xf32>
    %14 = math.absf %11 : vector<8x128xf32>
    %15 = arith.mulf %7, %7 : vector<8x128xf32>
    %16 = arith.mulf %9, %9 : vector<8x128xf32>
    %17 = arith.addf %15, %16 : vector<8x128xf32>
    %18 = arith.mulf %11, %11 : vector<8x128xf32>
    %19 = arith.addf %17, %18 : vector<8x128xf32>
    %cst_8 = arith.constant 0.000000e+00 : f32
    %20 = vector.broadcast %cst_8 : f32 to vector<8x128xf32>
    %21 = arith.cmpf ogt, %19, %20 : vector<8x128xf32>
    %22 = math.rsqrt %19 : vector<8x128xf32>
    %23 = arith.mulf %19, %22 : vector<8x128xf32>
    %cst_9 = arith.constant 0.000000e+00 : f32
    %24 = vector.broadcast %cst_9 : f32 to vector<8x128xf32>
    %25 = arith.select %21, %23, %24 : vector<8x128xi1>, vector<8x128xf32>
    %cst_10 = arith.constant 0.949999988 : f32
    %26 = vector.broadcast %cst_10 : f32 to vector<8x128xf32>
    %27 = arith.subf %25, %26 : vector<8x128xf32>
    %cst_11 = arith.constant 0.899999976 : f32
    %28 = vector.broadcast %cst_11 : f32 to vector<8x128xf32>
    %29 = arith.subf %25, %28 : vector<8x128xf32>
    %cst_12 = arith.constant 0.000000e+00 : f32
    %30 = vector.broadcast %cst_12 : f32 to vector<8x128xf32>
    %31 = arith.subf %30, %29 : vector<8x128xf32>
    %cst_13 = arith.constant 1.000000e+00 : f32
    %32 = vector.broadcast %cst_13 : f32 to vector<8x128xf32>
    %33 = arith.subf %12, %32 : vector<8x128xf32>
    %cst_14 = arith.constant 0.000000e+00 : f32
    %34 = vector.broadcast %cst_14 : f32 to vector<8x128xf32>
    %35 = arith.maximumf %33, %34 : vector<8x128xf32>
    %36 = arith.mulf %35, %35 : vector<8x128xf32>
    %cst_15 = arith.constant 1.000000e+00 : f32
    %37 = vector.broadcast %cst_15 : f32 to vector<8x128xf32>
    %38 = arith.subf %13, %37 : vector<8x128xf32>
    %cst_16 = arith.constant 0.000000e+00 : f32
    %39 = vector.broadcast %cst_16 : f32 to vector<8x128xf32>
    %40 = arith.maximumf %38, %39 : vector<8x128xf32>
    %41 = arith.mulf %40, %40 : vector<8x128xf32>
    %cst_17 = arith.constant 0.450000018 : f32
    %42 = vector.broadcast %cst_17 : f32 to vector<8x128xf32>
    %43 = arith.subf %5, %42 : vector<8x128xf32>
    %44 = math.absf %43 : vector<8x128xf32>
    %cst_18 = arith.constant 2.000000e-01 : f32
    %45 = vector.broadcast %cst_18 : f32 to vector<8x128xf32>
    %46 = arith.subf %44, %45 : vector<8x128xf32>
    %cst_19 = arith.constant 0.000000e+00 : f32
    %47 = vector.broadcast %cst_19 : f32 to vector<8x128xf32>
    %48 = arith.maximumf %46, %47 : vector<8x128xf32>
    %49 = arith.mulf %48, %48 : vector<8x128xf32>
    %50 = arith.addf %36, %41 : vector<8x128xf32>
    %51 = arith.addf %50, %49 : vector<8x128xf32>
    %cst_20 = arith.constant 0.000000e+00 : f32
    %52 = vector.broadcast %cst_20 : f32 to vector<8x128xf32>
    %53 = arith.cmpf ogt, %51, %52 : vector<8x128xf32>
    %54 = math.rsqrt %51 : vector<8x128xf32>
    %55 = arith.mulf %51, %54 : vector<8x128xf32>
    %cst_21 = arith.constant 0.000000e+00 : f32
    %56 = vector.broadcast %cst_21 : f32 to vector<8x128xf32>
    %57 = arith.select %53, %55, %56 : vector<8x128xi1>, vector<8x128xf32>
    %58 = arith.maximumf %33, %38 : vector<8x128xf32>
    %59 = arith.maximumf %58, %46 : vector<8x128xf32>
    %cst_22 = arith.constant 0.000000e+00 : f32
    %60 = vector.broadcast %cst_22 : f32 to vector<8x128xf32>
    %61 = arith.minimumf %59, %60 : vector<8x128xf32>
    %62 = arith.addf %57, %61 : vector<8x128xf32>
    %63 = arith.subf %31, %62 : vector<8x128xf32>
    %cst_23 = arith.constant -1.500000e-01 : f32
    %64 = vector.broadcast %cst_23 : f32 to vector<8x128xf32>
    %65 = arith.subf %5, %64 : vector<8x128xf32>
    %66 = math.absf %65 : vector<8x128xf32>
    %cst_24 = arith.constant 2.000000e-01 : f32
    %67 = vector.broadcast %cst_24 : f32 to vector<8x128xf32>
    %68 = arith.subf %66, %67 : vector<8x128xf32>
    %cst_25 = arith.constant 0.000000e+00 : f32
    %69 = vector.broadcast %cst_25 : f32 to vector<8x128xf32>
    %70 = arith.maximumf %68, %69 : vector<8x128xf32>
    %71 = arith.mulf %70, %70 : vector<8x128xf32>
    %72 = arith.addf %36, %41 : vector<8x128xf32>
    %73 = arith.addf %72, %71 : vector<8x128xf32>
    %cst_26 = arith.constant 0.000000e+00 : f32
    %74 = vector.broadcast %cst_26 : f32 to vector<8x128xf32>
    %75 = arith.cmpf ogt, %73, %74 : vector<8x128xf32>
    %76 = math.rsqrt %73 : vector<8x128xf32>
    %77 = arith.mulf %73, %76 : vector<8x128xf32>
    %cst_27 = arith.constant 0.000000e+00 : f32
    %78 = vector.broadcast %cst_27 : f32 to vector<8x128xf32>
    %79 = arith.select %75, %77, %78 : vector<8x128xi1>, vector<8x128xf32>
    %80 = arith.maximumf %33, %38 : vector<8x128xf32>
    %81 = arith.maximumf %80, %68 : vector<8x128xf32>
    %cst_28 = arith.constant 0.000000e+00 : f32
    %82 = vector.broadcast %cst_28 : f32 to vector<8x128xf32>
    %83 = arith.minimumf %81, %82 : vector<8x128xf32>
    %84 = arith.addf %79, %83 : vector<8x128xf32>
    %cst_29 = arith.constant 0.000000e+00 : f32
    %85 = vector.broadcast %cst_29 : f32 to vector<8x128xf32>
    %86 = arith.subf %85, %84 : vector<8x128xf32>
    %87 = arith.maximumf %63, %86 : vector<8x128xf32>
    %88 = arith.maximumf %27, %87 : vector<8x128xf32>
    %cst_30 = arith.constant 0.699999988 : f32
    %89 = vector.broadcast %cst_30 : f32 to vector<8x128xf32>
    %90 = arith.subf %12, %89 : vector<8x128xf32>
    %cst_31 = arith.constant 0.000000e+00 : f32
    %91 = vector.broadcast %cst_31 : f32 to vector<8x128xf32>
    %92 = arith.maximumf %90, %91 : vector<8x128xf32>
    %93 = arith.mulf %92, %92 : vector<8x128xf32>
    %cst_32 = arith.constant 0.699999988 : f32
    %94 = vector.broadcast %cst_32 : f32 to vector<8x128xf32>
    %95 = arith.subf %13, %94 : vector<8x128xf32>
    %cst_33 = arith.constant 0.000000e+00 : f32
    %96 = vector.broadcast %cst_33 : f32 to vector<8x128xf32>
    %97 = arith.maximumf %95, %96 : vector<8x128xf32>
    %98 = arith.mulf %97, %97 : vector<8x128xf32>
    %cst_34 = arith.constant 0.699999988 : f32
    %99 = vector.broadcast %cst_34 : f32 to vector<8x128xf32>
    %100 = arith.subf %14, %99 : vector<8x128xf32>
    %cst_35 = arith.constant 0.000000e+00 : f32
    %101 = vector.broadcast %cst_35 : f32 to vector<8x128xf32>
    %102 = arith.maximumf %100, %101 : vector<8x128xf32>
    %103 = arith.mulf %102, %102 : vector<8x128xf32>
    %104 = arith.addf %93, %98 : vector<8x128xf32>
    %105 = arith.addf %104, %103 : vector<8x128xf32>
    %cst_36 = arith.constant 0.000000e+00 : f32
    %106 = vector.broadcast %cst_36 : f32 to vector<8x128xf32>
    %107 = arith.cmpf ogt, %105, %106 : vector<8x128xf32>
    %108 = math.rsqrt %105 : vector<8x128xf32>
    %109 = arith.mulf %105, %108 : vector<8x128xf32>
    %cst_37 = arith.constant 0.000000e+00 : f32
    %110 = vector.broadcast %cst_37 : f32 to vector<8x128xf32>
    %111 = arith.select %107, %109, %110 : vector<8x128xi1>, vector<8x128xf32>
    %112 = arith.maximumf %90, %95 : vector<8x128xf32>
    %113 = arith.maximumf %112, %100 : vector<8x128xf32>
    %cst_38 = arith.constant 0.000000e+00 : f32
    %114 = vector.broadcast %cst_38 : f32 to vector<8x128xf32>
    %115 = arith.minimumf %113, %114 : vector<8x128xf32>
    %116 = arith.addf %111, %115 : vector<8x128xf32>
    %cst_39 = arith.constant 6.000000e-01 : f32
    %117 = vector.broadcast %cst_39 : f32 to vector<8x128xf32>
    %118 = arith.subf %12, %117 : vector<8x128xf32>
    %cst_40 = arith.constant 0.000000e+00 : f32
    %119 = vector.broadcast %cst_40 : f32 to vector<8x128xf32>
    %120 = arith.maximumf %118, %119 : vector<8x128xf32>
    %121 = arith.mulf %120, %120 : vector<8x128xf32>
    %cst_41 = arith.constant 6.000000e-01 : f32
    %122 = vector.broadcast %cst_41 : f32 to vector<8x128xf32>
    %123 = arith.subf %13, %122 : vector<8x128xf32>
    %cst_42 = arith.constant 0.000000e+00 : f32
    %124 = vector.broadcast %cst_42 : f32 to vector<8x128xf32>
    %125 = arith.maximumf %123, %124 : vector<8x128xf32>
    %126 = arith.mulf %125, %125 : vector<8x128xf32>
    %cst_43 = arith.constant 6.000000e-01 : f32
    %127 = vector.broadcast %cst_43 : f32 to vector<8x128xf32>
    %128 = arith.subf %14, %127 : vector<8x128xf32>
    %cst_44 = arith.constant 0.000000e+00 : f32
    %129 = vector.broadcast %cst_44 : f32 to vector<8x128xf32>
    %130 = arith.maximumf %128, %129 : vector<8x128xf32>
    %131 = arith.mulf %130, %130 : vector<8x128xf32>
    %132 = arith.addf %121, %126 : vector<8x128xf32>
    %133 = arith.addf %132, %131 : vector<8x128xf32>
    %cst_45 = arith.constant 0.000000e+00 : f32
    %134 = vector.broadcast %cst_45 : f32 to vector<8x128xf32>
    %135 = arith.cmpf ogt, %133, %134 : vector<8x128xf32>
    %136 = math.rsqrt %133 : vector<8x128xf32>
    %137 = arith.mulf %133, %136 : vector<8x128xf32>
    %cst_46 = arith.constant 0.000000e+00 : f32
    %138 = vector.broadcast %cst_46 : f32 to vector<8x128xf32>
    %139 = arith.select %135, %137, %138 : vector<8x128xi1>, vector<8x128xf32>
    %140 = arith.maximumf %118, %123 : vector<8x128xf32>
    %141 = arith.maximumf %140, %128 : vector<8x128xf32>
    %cst_47 = arith.constant 0.000000e+00 : f32
    %142 = vector.broadcast %cst_47 : f32 to vector<8x128xf32>
    %143 = arith.minimumf %141, %142 : vector<8x128xf32>
    %144 = arith.addf %139, %143 : vector<8x128xf32>
    %cst_48 = arith.constant 0.000000e+00 : f32
    %145 = vector.broadcast %cst_48 : f32 to vector<8x128xf32>
    %146 = arith.subf %145, %144 : vector<8x128xf32>
    %147 = arith.maximumf %116, %146 : vector<8x128xf32>
    %cst_49 = arith.constant 7.500000e-01 : f32
    %148 = vector.broadcast %cst_49 : f32 to vector<8x128xf32>
    %149 = arith.subf %1, %148 : vector<8x128xf32>
    %150 = math.absf %149 : vector<8x128xf32>
    %cst_50 = arith.constant 2.500000e-01 : f32
    %151 = vector.broadcast %cst_50 : f32 to vector<8x128xf32>
    %152 = arith.subf %150, %151 : vector<8x128xf32>
    %cst_51 = arith.constant 0.000000e+00 : f32
    %153 = vector.broadcast %cst_51 : f32 to vector<8x128xf32>
    %154 = arith.maximumf %152, %153 : vector<8x128xf32>
    %155 = arith.mulf %154, %154 : vector<8x128xf32>
    %cst_52 = arith.constant 2.500000e-01 : f32
    %156 = vector.broadcast %cst_52 : f32 to vector<8x128xf32>
    %157 = arith.subf %13, %156 : vector<8x128xf32>
    %cst_53 = arith.constant 0.000000e+00 : f32
    %158 = vector.broadcast %cst_53 : f32 to vector<8x128xf32>
    %159 = arith.maximumf %157, %158 : vector<8x128xf32>
    %160 = arith.mulf %159, %159 : vector<8x128xf32>
    %cst_54 = arith.constant 2.500000e-01 : f32
    %161 = vector.broadcast %cst_54 : f32 to vector<8x128xf32>
    %162 = arith.subf %14, %161 : vector<8x128xf32>
    %cst_55 = arith.constant 0.000000e+00 : f32
    %163 = vector.broadcast %cst_55 : f32 to vector<8x128xf32>
    %164 = arith.maximumf %162, %163 : vector<8x128xf32>
    %165 = arith.mulf %164, %164 : vector<8x128xf32>
    %166 = arith.addf %155, %160 : vector<8x128xf32>
    %167 = arith.addf %166, %165 : vector<8x128xf32>
    %cst_56 = arith.constant 0.000000e+00 : f32
    %168 = vector.broadcast %cst_56 : f32 to vector<8x128xf32>
    %169 = arith.cmpf ogt, %167, %168 : vector<8x128xf32>
    %170 = math.rsqrt %167 : vector<8x128xf32>
    %171 = arith.mulf %167, %170 : vector<8x128xf32>
    %cst_57 = arith.constant 0.000000e+00 : f32
    %172 = vector.broadcast %cst_57 : f32 to vector<8x128xf32>
    %173 = arith.select %169, %171, %172 : vector<8x128xi1>, vector<8x128xf32>
    %174 = arith.maximumf %152, %157 : vector<8x128xf32>
    %175 = arith.maximumf %174, %162 : vector<8x128xf32>
    %cst_58 = arith.constant 0.000000e+00 : f32
    %176 = vector.broadcast %cst_58 : f32 to vector<8x128xf32>
    %177 = arith.minimumf %175, %176 : vector<8x128xf32>
    %178 = arith.addf %173, %177 : vector<8x128xf32>
    %cst_59 = arith.constant 0.000000e+00 : f32
    %179 = vector.broadcast %cst_59 : f32 to vector<8x128xf32>
    %180 = arith.subf %179, %178 : vector<8x128xf32>
    %181 = arith.maximumf %147, %180 : vector<8x128xf32>
    %cst_60 = arith.constant -6.500000e-01 : f32
    %182 = vector.broadcast %cst_60 : f32 to vector<8x128xf32>
    %183 = arith.subf %1, %182 : vector<8x128xf32>
    %184 = math.absf %183 : vector<8x128xf32>
    %cst_61 = arith.constant 2.500000e-01 : f32
    %185 = vector.broadcast %cst_61 : f32 to vector<8x128xf32>
    %186 = arith.subf %184, %185 : vector<8x128xf32>
    %cst_62 = arith.constant 0.000000e+00 : f32
    %187 = vector.broadcast %cst_62 : f32 to vector<8x128xf32>
    %188 = arith.maximumf %186, %187 : vector<8x128xf32>
    %189 = arith.mulf %188, %188 : vector<8x128xf32>
    %190 = arith.addf %189, %160 : vector<8x128xf32>
    %191 = arith.addf %190, %165 : vector<8x128xf32>
    %cst_63 = arith.constant 0.000000e+00 : f32
    %192 = vector.broadcast %cst_63 : f32 to vector<8x128xf32>
    %193 = arith.cmpf ogt, %191, %192 : vector<8x128xf32>
    %194 = math.rsqrt %191 : vector<8x128xf32>
    %195 = arith.mulf %191, %194 : vector<8x128xf32>
    %cst_64 = arith.constant 0.000000e+00 : f32
    %196 = vector.broadcast %cst_64 : f32 to vector<8x128xf32>
    %197 = arith.select %193, %195, %196 : vector<8x128xi1>, vector<8x128xf32>
    %198 = arith.maximumf %186, %157 : vector<8x128xf32>
    %199 = arith.maximumf %198, %162 : vector<8x128xf32>
    %cst_65 = arith.constant 0.000000e+00 : f32
    %200 = vector.broadcast %cst_65 : f32 to vector<8x128xf32>
    %201 = arith.minimumf %199, %200 : vector<8x128xf32>
    %202 = arith.addf %197, %201 : vector<8x128xf32>
    %cst_66 = arith.constant 0.000000e+00 : f32
    %203 = vector.broadcast %cst_66 : f32 to vector<8x128xf32>
    %204 = arith.subf %203, %202 : vector<8x128xf32>
    %205 = arith.maximumf %181, %204 : vector<8x128xf32>
    %cst_67 = arith.constant 2.500000e-01 : f32
    %206 = vector.broadcast %cst_67 : f32 to vector<8x128xf32>
    %207 = arith.subf %12, %206 : vector<8x128xf32>
    %cst_68 = arith.constant 0.000000e+00 : f32
    %208 = vector.broadcast %cst_68 : f32 to vector<8x128xf32>
    %209 = arith.maximumf %207, %208 : vector<8x128xf32>
    %210 = arith.mulf %209, %209 : vector<8x128xf32>
    %cst_69 = arith.constant 0.599999964 : f32
    %211 = vector.broadcast %cst_69 : f32 to vector<8x128xf32>
    %212 = arith.subf %3, %211 : vector<8x128xf32>
    %213 = math.absf %212 : vector<8x128xf32>
    %cst_70 = arith.constant 2.500000e-01 : f32
    %214 = vector.broadcast %cst_70 : f32 to vector<8x128xf32>
    %215 = arith.subf %213, %214 : vector<8x128xf32>
    %cst_71 = arith.constant 0.000000e+00 : f32
    %216 = vector.broadcast %cst_71 : f32 to vector<8x128xf32>
    %217 = arith.maximumf %215, %216 : vector<8x128xf32>
    %218 = arith.mulf %217, %217 : vector<8x128xf32>
    %219 = arith.addf %210, %218 : vector<8x128xf32>
    %220 = arith.addf %219, %165 : vector<8x128xf32>
    %cst_72 = arith.constant 0.000000e+00 : f32
    %221 = vector.broadcast %cst_72 : f32 to vector<8x128xf32>
    %222 = arith.cmpf ogt, %220, %221 : vector<8x128xf32>
    %223 = math.rsqrt %220 : vector<8x128xf32>
    %224 = arith.mulf %220, %223 : vector<8x128xf32>
    %cst_73 = arith.constant 0.000000e+00 : f32
    %225 = vector.broadcast %cst_73 : f32 to vector<8x128xf32>
    %226 = arith.select %222, %224, %225 : vector<8x128xi1>, vector<8x128xf32>
    %227 = arith.maximumf %207, %215 : vector<8x128xf32>
    %228 = arith.maximumf %227, %162 : vector<8x128xf32>
    %cst_74 = arith.constant 0.000000e+00 : f32
    %229 = vector.broadcast %cst_74 : f32 to vector<8x128xf32>
    %230 = arith.minimumf %228, %229 : vector<8x128xf32>
    %231 = arith.addf %226, %230 : vector<8x128xf32>
    %cst_75 = arith.constant 0.000000e+00 : f32
    %232 = vector.broadcast %cst_75 : f32 to vector<8x128xf32>
    %233 = arith.subf %232, %231 : vector<8x128xf32>
    %234 = arith.maximumf %205, %233 : vector<8x128xf32>
    %cst_76 = arith.constant -8.000000e-01 : f32
    %235 = vector.broadcast %cst_76 : f32 to vector<8x128xf32>
    %236 = arith.subf %3, %235 : vector<8x128xf32>
    %237 = math.absf %236 : vector<8x128xf32>
    %cst_77 = arith.constant 2.500000e-01 : f32
    %238 = vector.broadcast %cst_77 : f32 to vector<8x128xf32>
    %239 = arith.subf %237, %238 : vector<8x128xf32>
    %cst_78 = arith.constant 0.000000e+00 : f32
    %240 = vector.broadcast %cst_78 : f32 to vector<8x128xf32>
    %241 = arith.maximumf %239, %240 : vector<8x128xf32>
    %242 = arith.mulf %241, %241 : vector<8x128xf32>
    %243 = arith.addf %210, %242 : vector<8x128xf32>
    %244 = arith.addf %243, %165 : vector<8x128xf32>
    %cst_79 = arith.constant 0.000000e+00 : f32
    %245 = vector.broadcast %cst_79 : f32 to vector<8x128xf32>
    %246 = arith.cmpf ogt, %244, %245 : vector<8x128xf32>
    %247 = math.rsqrt %244 : vector<8x128xf32>
    %248 = arith.mulf %244, %247 : vector<8x128xf32>
    %cst_80 = arith.constant 0.000000e+00 : f32
    %249 = vector.broadcast %cst_80 : f32 to vector<8x128xf32>
    %250 = arith.select %246, %248, %249 : vector<8x128xi1>, vector<8x128xf32>
    %251 = arith.maximumf %207, %239 : vector<8x128xf32>
    %252 = arith.maximumf %251, %162 : vector<8x128xf32>
    %cst_81 = arith.constant 0.000000e+00 : f32
    %253 = vector.broadcast %cst_81 : f32 to vector<8x128xf32>
    %254 = arith.minimumf %252, %253 : vector<8x128xf32>
    %255 = arith.addf %250, %254 : vector<8x128xf32>
    %cst_82 = arith.constant 0.000000e+00 : f32
    %256 = vector.broadcast %cst_82 : f32 to vector<8x128xf32>
    %257 = arith.subf %256, %255 : vector<8x128xf32>
    %258 = arith.maximumf %234, %257 : vector<8x128xf32>
    %cst_83 = arith.constant 8.500000e-01 : f32
    %259 = vector.broadcast %cst_83 : f32 to vector<8x128xf32>
    %260 = arith.subf %5, %259 : vector<8x128xf32>
    %261 = math.absf %260 : vector<8x128xf32>
    %cst_84 = arith.constant 2.500000e-01 : f32
    %262 = vector.broadcast %cst_84 : f32 to vector<8x128xf32>
    %263 = arith.subf %261, %262 : vector<8x128xf32>
    %cst_85 = arith.constant 0.000000e+00 : f32
    %264 = vector.broadcast %cst_85 : f32 to vector<8x128xf32>
    %265 = arith.maximumf %263, %264 : vector<8x128xf32>
    %266 = arith.mulf %265, %265 : vector<8x128xf32>
    %267 = arith.addf %210, %160 : vector<8x128xf32>
    %268 = arith.addf %267, %266 : vector<8x128xf32>
    %cst_86 = arith.constant 0.000000e+00 : f32
    %269 = vector.broadcast %cst_86 : f32 to vector<8x128xf32>
    %270 = arith.cmpf ogt, %268, %269 : vector<8x128xf32>
    %271 = math.rsqrt %268 : vector<8x128xf32>
    %272 = arith.mulf %268, %271 : vector<8x128xf32>
    %cst_87 = arith.constant 0.000000e+00 : f32
    %273 = vector.broadcast %cst_87 : f32 to vector<8x128xf32>
    %274 = arith.select %270, %272, %273 : vector<8x128xi1>, vector<8x128xf32>
    %275 = arith.maximumf %207, %157 : vector<8x128xf32>
    %276 = arith.maximumf %275, %263 : vector<8x128xf32>
    %cst_88 = arith.constant 0.000000e+00 : f32
    %277 = vector.broadcast %cst_88 : f32 to vector<8x128xf32>
    %278 = arith.minimumf %276, %277 : vector<8x128xf32>
    %279 = arith.addf %274, %278 : vector<8x128xf32>
    %cst_89 = arith.constant 0.000000e+00 : f32
    %280 = vector.broadcast %cst_89 : f32 to vector<8x128xf32>
    %281 = arith.subf %280, %279 : vector<8x128xf32>
    %282 = arith.maximumf %258, %281 : vector<8x128xf32>
    %cst_90 = arith.constant -0.549999952 : f32
    %283 = vector.broadcast %cst_90 : f32 to vector<8x128xf32>
    %284 = arith.subf %5, %283 : vector<8x128xf32>
    %285 = math.absf %284 : vector<8x128xf32>
    %cst_91 = arith.constant 2.500000e-01 : f32
    %286 = vector.broadcast %cst_91 : f32 to vector<8x128xf32>
    %287 = arith.subf %285, %286 : vector<8x128xf32>
    %cst_92 = arith.constant 0.000000e+00 : f32
    %288 = vector.broadcast %cst_92 : f32 to vector<8x128xf32>
    %289 = arith.maximumf %287, %288 : vector<8x128xf32>
    %290 = arith.mulf %289, %289 : vector<8x128xf32>
    %291 = arith.addf %210, %160 : vector<8x128xf32>
    %292 = arith.addf %291, %290 : vector<8x128xf32>
    %cst_93 = arith.constant 0.000000e+00 : f32
    %293 = vector.broadcast %cst_93 : f32 to vector<8x128xf32>
    %294 = arith.cmpf ogt, %292, %293 : vector<8x128xf32>
    %295 = math.rsqrt %292 : vector<8x128xf32>
    %296 = arith.mulf %292, %295 : vector<8x128xf32>
    %cst_94 = arith.constant 0.000000e+00 : f32
    %297 = vector.broadcast %cst_94 : f32 to vector<8x128xf32>
    %298 = arith.select %294, %296, %297 : vector<8x128xi1>, vector<8x128xf32>
    %299 = arith.maximumf %207, %157 : vector<8x128xf32>
    %300 = arith.maximumf %299, %287 : vector<8x128xf32>
    %cst_95 = arith.constant 0.000000e+00 : f32
    %301 = vector.broadcast %cst_95 : f32 to vector<8x128xf32>
    %302 = arith.minimumf %300, %301 : vector<8x128xf32>
    %303 = arith.addf %298, %302 : vector<8x128xf32>
    %cst_96 = arith.constant 0.000000e+00 : f32
    %304 = vector.broadcast %cst_96 : f32 to vector<8x128xf32>
    %305 = arith.subf %304, %303 : vector<8x128xf32>
    %306 = arith.maximumf %282, %305 : vector<8x128xf32>
    %307 = arith.minimumf %88, %306 : vector<8x128xf32>
    %cst_97 = arith.constant 6.000000e-01 : f32
    %308 = vector.broadcast %cst_97 : f32 to vector<8x128xf32>
    %309 = arith.subf %25, %308 : vector<8x128xf32>
    %310 = arith.minimumf %307, %309 : vector<8x128xf32>
    %cst_98 = arith.constant 5.500000e-01 : f32
    %311 = vector.broadcast %cst_98 : f32 to vector<8x128xf32>
    %312 = arith.subf %25, %311 : vector<8x128xf32>
    %cst_99 = arith.constant 0.000000e+00 : f32
    %313 = vector.broadcast %cst_99 : f32 to vector<8x128xf32>
    %314 = arith.subf %313, %312 : vector<8x128xf32>
    %315 = arith.maximumf %310, %314 : vector<8x128xf32>
    %cst_100 = arith.constant 5.000000e-01 : f32
    %316 = vector.broadcast %cst_100 : f32 to vector<8x128xf32>
    %317 = arith.subf %1, %316 : vector<8x128xf32>
    %318 = math.absf %317 : vector<8x128xf32>
    %cst_101 = arith.constant 1.500000e-01 : f32
    %319 = vector.broadcast %cst_101 : f32 to vector<8x128xf32>
    %320 = arith.subf %318, %319 : vector<8x128xf32>
    %cst_102 = arith.constant 0.000000e+00 : f32
    %321 = vector.broadcast %cst_102 : f32 to vector<8x128xf32>
    %322 = arith.maximumf %320, %321 : vector<8x128xf32>
    %323 = arith.mulf %322, %322 : vector<8x128xf32>
    %cst_103 = arith.constant 1.750000e-01 : f32
    %324 = vector.broadcast %cst_103 : f32 to vector<8x128xf32>
    %325 = arith.subf %13, %324 : vector<8x128xf32>
    %cst_104 = arith.constant 0.000000e+00 : f32
    %326 = vector.broadcast %cst_104 : f32 to vector<8x128xf32>
    %327 = arith.maximumf %325, %326 : vector<8x128xf32>
    %328 = arith.mulf %327, %327 : vector<8x128xf32>
    %cst_105 = arith.constant 1.750000e-01 : f32
    %329 = vector.broadcast %cst_105 : f32 to vector<8x128xf32>
    %330 = arith.subf %14, %329 : vector<8x128xf32>
    %cst_106 = arith.constant 0.000000e+00 : f32
    %331 = vector.broadcast %cst_106 : f32 to vector<8x128xf32>
    %332 = arith.maximumf %330, %331 : vector<8x128xf32>
    %333 = arith.mulf %332, %332 : vector<8x128xf32>
    %334 = arith.addf %323, %328 : vector<8x128xf32>
    %335 = arith.addf %334, %333 : vector<8x128xf32>
    %cst_107 = arith.constant 0.000000e+00 : f32
    %336 = vector.broadcast %cst_107 : f32 to vector<8x128xf32>
    %337 = arith.cmpf ogt, %335, %336 : vector<8x128xf32>
    %338 = math.rsqrt %335 : vector<8x128xf32>
    %339 = arith.mulf %335, %338 : vector<8x128xf32>
    %cst_108 = arith.constant 0.000000e+00 : f32
    %340 = vector.broadcast %cst_108 : f32 to vector<8x128xf32>
    %341 = arith.select %337, %339, %340 : vector<8x128xi1>, vector<8x128xf32>
    %342 = arith.maximumf %320, %325 : vector<8x128xf32>
    %343 = arith.maximumf %342, %330 : vector<8x128xf32>
    %cst_109 = arith.constant 0.000000e+00 : f32
    %344 = vector.broadcast %cst_109 : f32 to vector<8x128xf32>
    %345 = arith.minimumf %343, %344 : vector<8x128xf32>
    %346 = arith.addf %341, %345 : vector<8x128xf32>
    %cst_110 = arith.constant 0.000000e+00 : f32
    %347 = vector.broadcast %cst_110 : f32 to vector<8x128xf32>
    %348 = arith.subf %347, %346 : vector<8x128xf32>
    %349 = arith.maximumf %315, %348 : vector<8x128xf32>
    %cst_111 = arith.constant -0.399999976 : f32
    %350 = vector.broadcast %cst_111 : f32 to vector<8x128xf32>
    %351 = arith.subf %1, %350 : vector<8x128xf32>
    %352 = math.absf %351 : vector<8x128xf32>
    %cst_112 = arith.constant 1.500000e-01 : f32
    %353 = vector.broadcast %cst_112 : f32 to vector<8x128xf32>
    %354 = arith.subf %352, %353 : vector<8x128xf32>
    %cst_113 = arith.constant 0.000000e+00 : f32
    %355 = vector.broadcast %cst_113 : f32 to vector<8x128xf32>
    %356 = arith.maximumf %354, %355 : vector<8x128xf32>
    %357 = arith.mulf %356, %356 : vector<8x128xf32>
    %358 = arith.addf %357, %328 : vector<8x128xf32>
    %359 = arith.addf %358, %333 : vector<8x128xf32>
    %cst_114 = arith.constant 0.000000e+00 : f32
    %360 = vector.broadcast %cst_114 : f32 to vector<8x128xf32>
    %361 = arith.cmpf ogt, %359, %360 : vector<8x128xf32>
    %362 = math.rsqrt %359 : vector<8x128xf32>
    %363 = arith.mulf %359, %362 : vector<8x128xf32>
    %cst_115 = arith.constant 0.000000e+00 : f32
    %364 = vector.broadcast %cst_115 : f32 to vector<8x128xf32>
    %365 = arith.select %361, %363, %364 : vector<8x128xi1>, vector<8x128xf32>
    %366 = arith.maximumf %354, %325 : vector<8x128xf32>
    %367 = arith.maximumf %366, %330 : vector<8x128xf32>
    %cst_116 = arith.constant 0.000000e+00 : f32
    %368 = vector.broadcast %cst_116 : f32 to vector<8x128xf32>
    %369 = arith.minimumf %367, %368 : vector<8x128xf32>
    %370 = arith.addf %365, %369 : vector<8x128xf32>
    %cst_117 = arith.constant 0.000000e+00 : f32
    %371 = vector.broadcast %cst_117 : f32 to vector<8x128xf32>
    %372 = arith.subf %371, %370 : vector<8x128xf32>
    %373 = arith.maximumf %349, %372 : vector<8x128xf32>
    %cst_118 = arith.constant 1.750000e-01 : f32
    %374 = vector.broadcast %cst_118 : f32 to vector<8x128xf32>
    %375 = arith.subf %12, %374 : vector<8x128xf32>
    %cst_119 = arith.constant 0.000000e+00 : f32
    %376 = vector.broadcast %cst_119 : f32 to vector<8x128xf32>
    %377 = arith.maximumf %375, %376 : vector<8x128xf32>
    %378 = arith.mulf %377, %377 : vector<8x128xf32>
    %cst_120 = arith.constant 3.500000e-01 : f32
    %379 = vector.broadcast %cst_120 : f32 to vector<8x128xf32>
    %380 = arith.subf %3, %379 : vector<8x128xf32>
    %381 = math.absf %380 : vector<8x128xf32>
    %cst_121 = arith.constant 1.500000e-01 : f32
    %382 = vector.broadcast %cst_121 : f32 to vector<8x128xf32>
    %383 = arith.subf %381, %382 : vector<8x128xf32>
    %cst_122 = arith.constant 0.000000e+00 : f32
    %384 = vector.broadcast %cst_122 : f32 to vector<8x128xf32>
    %385 = arith.maximumf %383, %384 : vector<8x128xf32>
    %386 = arith.mulf %385, %385 : vector<8x128xf32>
    %387 = arith.addf %378, %386 : vector<8x128xf32>
    %388 = arith.addf %387, %333 : vector<8x128xf32>
    %cst_123 = arith.constant 0.000000e+00 : f32
    %389 = vector.broadcast %cst_123 : f32 to vector<8x128xf32>
    %390 = arith.cmpf ogt, %388, %389 : vector<8x128xf32>
    %391 = math.rsqrt %388 : vector<8x128xf32>
    %392 = arith.mulf %388, %391 : vector<8x128xf32>
    %cst_124 = arith.constant 0.000000e+00 : f32
    %393 = vector.broadcast %cst_124 : f32 to vector<8x128xf32>
    %394 = arith.select %390, %392, %393 : vector<8x128xi1>, vector<8x128xf32>
    %395 = arith.maximumf %375, %383 : vector<8x128xf32>
    %396 = arith.maximumf %395, %330 : vector<8x128xf32>
    %cst_125 = arith.constant 0.000000e+00 : f32
    %397 = vector.broadcast %cst_125 : f32 to vector<8x128xf32>
    %398 = arith.minimumf %396, %397 : vector<8x128xf32>
    %399 = arith.addf %394, %398 : vector<8x128xf32>
    %cst_126 = arith.constant 0.000000e+00 : f32
    %400 = vector.broadcast %cst_126 : f32 to vector<8x128xf32>
    %401 = arith.subf %400, %399 : vector<8x128xf32>
    %402 = arith.maximumf %373, %401 : vector<8x128xf32>
    %cst_127 = arith.constant -5.500000e-01 : f32
    %403 = vector.broadcast %cst_127 : f32 to vector<8x128xf32>
    %404 = arith.subf %3, %403 : vector<8x128xf32>
    %405 = math.absf %404 : vector<8x128xf32>
    %cst_128 = arith.constant 1.500000e-01 : f32
    %406 = vector.broadcast %cst_128 : f32 to vector<8x128xf32>
    %407 = arith.subf %405, %406 : vector<8x128xf32>
    %cst_129 = arith.constant 0.000000e+00 : f32
    %408 = vector.broadcast %cst_129 : f32 to vector<8x128xf32>
    %409 = arith.maximumf %407, %408 : vector<8x128xf32>
    %410 = arith.mulf %409, %409 : vector<8x128xf32>
    %411 = arith.addf %378, %410 : vector<8x128xf32>
    %412 = arith.addf %411, %333 : vector<8x128xf32>
    %cst_130 = arith.constant 0.000000e+00 : f32
    %413 = vector.broadcast %cst_130 : f32 to vector<8x128xf32>
    %414 = arith.cmpf ogt, %412, %413 : vector<8x128xf32>
    %415 = math.rsqrt %412 : vector<8x128xf32>
    %416 = arith.mulf %412, %415 : vector<8x128xf32>
    %cst_131 = arith.constant 0.000000e+00 : f32
    %417 = vector.broadcast %cst_131 : f32 to vector<8x128xf32>
    %418 = arith.select %414, %416, %417 : vector<8x128xi1>, vector<8x128xf32>
    %419 = arith.maximumf %375, %407 : vector<8x128xf32>
    %420 = arith.maximumf %419, %330 : vector<8x128xf32>
    %cst_132 = arith.constant 0.000000e+00 : f32
    %421 = vector.broadcast %cst_132 : f32 to vector<8x128xf32>
    %422 = arith.minimumf %420, %421 : vector<8x128xf32>
    %423 = arith.addf %418, %422 : vector<8x128xf32>
    %cst_133 = arith.constant 0.000000e+00 : f32
    %424 = vector.broadcast %cst_133 : f32 to vector<8x128xf32>
    %425 = arith.subf %424, %423 : vector<8x128xf32>
    %426 = arith.maximumf %402, %425 : vector<8x128xf32>
    %cst_134 = arith.constant 6.000000e-01 : f32
    %427 = vector.broadcast %cst_134 : f32 to vector<8x128xf32>
    %428 = arith.subf %5, %427 : vector<8x128xf32>
    %429 = math.absf %428 : vector<8x128xf32>
    %cst_135 = arith.constant 1.500000e-01 : f32
    %430 = vector.broadcast %cst_135 : f32 to vector<8x128xf32>
    %431 = arith.subf %429, %430 : vector<8x128xf32>
    %cst_136 = arith.constant 0.000000e+00 : f32
    %432 = vector.broadcast %cst_136 : f32 to vector<8x128xf32>
    %433 = arith.maximumf %431, %432 : vector<8x128xf32>
    %434 = arith.mulf %433, %433 : vector<8x128xf32>
    %435 = arith.addf %378, %328 : vector<8x128xf32>
    %436 = arith.addf %435, %434 : vector<8x128xf32>
    %cst_137 = arith.constant 0.000000e+00 : f32
    %437 = vector.broadcast %cst_137 : f32 to vector<8x128xf32>
    %438 = arith.cmpf ogt, %436, %437 : vector<8x128xf32>
    %439 = math.rsqrt %436 : vector<8x128xf32>
    %440 = arith.mulf %436, %439 : vector<8x128xf32>
    %cst_138 = arith.constant 0.000000e+00 : f32
    %441 = vector.broadcast %cst_138 : f32 to vector<8x128xf32>
    %442 = arith.select %438, %440, %441 : vector<8x128xi1>, vector<8x128xf32>
    %443 = arith.maximumf %375, %325 : vector<8x128xf32>
    %444 = arith.maximumf %443, %431 : vector<8x128xf32>
    %cst_139 = arith.constant 0.000000e+00 : f32
    %445 = vector.broadcast %cst_139 : f32 to vector<8x128xf32>
    %446 = arith.minimumf %444, %445 : vector<8x128xf32>
    %447 = arith.addf %442, %446 : vector<8x128xf32>
    %cst_140 = arith.constant 0.000000e+00 : f32
    %448 = vector.broadcast %cst_140 : f32 to vector<8x128xf32>
    %449 = arith.subf %448, %447 : vector<8x128xf32>
    %450 = arith.maximumf %426, %449 : vector<8x128xf32>
    %cst_141 = arith.constant -0.299999982 : f32
    %451 = vector.broadcast %cst_141 : f32 to vector<8x128xf32>
    %452 = arith.subf %5, %451 : vector<8x128xf32>
    %453 = math.absf %452 : vector<8x128xf32>
    %cst_142 = arith.constant 1.500000e-01 : f32
    %454 = vector.broadcast %cst_142 : f32 to vector<8x128xf32>
    %455 = arith.subf %453, %454 : vector<8x128xf32>
    %cst_143 = arith.constant 0.000000e+00 : f32
    %456 = vector.broadcast %cst_143 : f32 to vector<8x128xf32>
    %457 = arith.maximumf %455, %456 : vector<8x128xf32>
    %458 = arith.mulf %457, %457 : vector<8x128xf32>
    %459 = arith.addf %378, %328 : vector<8x128xf32>
    %460 = arith.addf %459, %458 : vector<8x128xf32>
    %cst_144 = arith.constant 0.000000e+00 : f32
    %461 = vector.broadcast %cst_144 : f32 to vector<8x128xf32>
    %462 = arith.cmpf ogt, %460, %461 : vector<8x128xf32>
    %463 = math.rsqrt %460 : vector<8x128xf32>
    %464 = arith.mulf %460, %463 : vector<8x128xf32>
    %cst_145 = arith.constant 0.000000e+00 : f32
    %465 = vector.broadcast %cst_145 : f32 to vector<8x128xf32>
    %466 = arith.select %462, %464, %465 : vector<8x128xi1>, vector<8x128xf32>
    %467 = arith.maximumf %375, %325 : vector<8x128xf32>
    %468 = arith.maximumf %467, %455 : vector<8x128xf32>
    %cst_146 = arith.constant 0.000000e+00 : f32
    %469 = vector.broadcast %cst_146 : f32 to vector<8x128xf32>
    %470 = arith.minimumf %468, %469 : vector<8x128xf32>
    %471 = arith.addf %466, %470 : vector<8x128xf32>
    %cst_147 = arith.constant 0.000000e+00 : f32
    %472 = vector.broadcast %cst_147 : f32 to vector<8x128xf32>
    %473 = arith.subf %472, %471 : vector<8x128xf32>
    %474 = arith.maximumf %450, %473 : vector<8x128xf32>
    %cst_148 = arith.constant 4.500000e-01 : f32
    %475 = vector.broadcast %cst_148 : f32 to vector<8x128xf32>
    %476 = arith.subf %12, %475 : vector<8x128xf32>
    %cst_149 = arith.constant 0.000000e+00 : f32
    %477 = vector.broadcast %cst_149 : f32 to vector<8x128xf32>
    %478 = arith.maximumf %476, %477 : vector<8x128xf32>
    %479 = arith.mulf %478, %478 : vector<8x128xf32>
    %cst_150 = arith.constant 4.500000e-01 : f32
    %480 = vector.broadcast %cst_150 : f32 to vector<8x128xf32>
    %481 = arith.subf %13, %480 : vector<8x128xf32>
    %cst_151 = arith.constant 0.000000e+00 : f32
    %482 = vector.broadcast %cst_151 : f32 to vector<8x128xf32>
    %483 = arith.maximumf %481, %482 : vector<8x128xf32>
    %484 = arith.mulf %483, %483 : vector<8x128xf32>
    %cst_152 = arith.constant 4.500000e-01 : f32
    %485 = vector.broadcast %cst_152 : f32 to vector<8x128xf32>
    %486 = arith.subf %14, %485 : vector<8x128xf32>
    %cst_153 = arith.constant 0.000000e+00 : f32
    %487 = vector.broadcast %cst_153 : f32 to vector<8x128xf32>
    %488 = arith.maximumf %486, %487 : vector<8x128xf32>
    %489 = arith.mulf %488, %488 : vector<8x128xf32>
    %490 = arith.addf %479, %484 : vector<8x128xf32>
    %491 = arith.addf %490, %489 : vector<8x128xf32>
    %cst_154 = arith.constant 0.000000e+00 : f32
    %492 = vector.broadcast %cst_154 : f32 to vector<8x128xf32>
    %493 = arith.cmpf ogt, %491, %492 : vector<8x128xf32>
    %494 = math.rsqrt %491 : vector<8x128xf32>
    %495 = arith.mulf %491, %494 : vector<8x128xf32>
    %cst_155 = arith.constant 0.000000e+00 : f32
    %496 = vector.broadcast %cst_155 : f32 to vector<8x128xf32>
    %497 = arith.select %493, %495, %496 : vector<8x128xi1>, vector<8x128xf32>
    %498 = arith.maximumf %476, %481 : vector<8x128xf32>
    %499 = arith.maximumf %498, %486 : vector<8x128xf32>
    %cst_156 = arith.constant 0.000000e+00 : f32
    %500 = vector.broadcast %cst_156 : f32 to vector<8x128xf32>
    %501 = arith.minimumf %499, %500 : vector<8x128xf32>
    %502 = arith.addf %497, %501 : vector<8x128xf32>
    %503 = arith.minimumf %474, %502 : vector<8x128xf32>
    %c0_157 = arith.constant 0 : index
    %c0_158 = arith.constant 0 : index
    %504 = vector.load %arg2[%c0_157, %c0_158] : memref<8x128xf32, #tpu.memory_space<vmem>>, vector<8x128xf32>
    tpu.vector_store %arg2[%c0_157, %c0_158], %503 {strides = array<i32>} : memref<8x128xf32, #tpu.memory_space<vmem>>, vector<8x128xf32>,
    return
  }
  func.func @transform_0(%arg0: i32) -> (i32, i32, i32) {
    %c0_i32 = arith.constant 0 : i32
    %c0_i32_0 = arith.constant 0 : i32
    %c0_i32_1 = arith.constant 0 : i32
    return %c0_i32, %arg0, %c0_i32_0 : i32, i32, i32
  }
  func.func @transform_1(%arg0: i32) -> (i32, i32) {
    %c0_i32 = arith.constant 0 : i32
    %c0_i32_0 = arith.constant 0 : i32
    return %arg0, %c0_i32 : i32, i32
  }
}

</mosaic_0001>

<llo_original>
// kernel: tpu_custom_call.1
$region0: #{tpu_custom_call.1}
  #allocation0 [shape = 'u32[]', space=smem, size = 0x4, offset = 0x4, fixed_abs, tag = 'smem constant byte address 0x4 - core index']
  #allocation1 [shape = 'u32[144,128]{1,0:T(1,128)}', space=vmem, size = 0x12000, scoped, tag = 'internal scratch']
  %s0 = inlined_call_operand.hbm [shape: f32[3,8,128], index: 0, kind: input, shape index: {}]
  %s1 = inlined_call_operand.hbm [shape: f32[8,128], index: 1, kind: output, shape index: {}]
  %s2 = sld [smem:[#allocation0]]
  $region18: #{tpu_custom_call.1} parent=0
    _
  %s4 = ssub.s32 1, %s2
  %s5 = scalar_select 0, %s4, %s2
  $region1: #{tpu_custom_call.1} parent=0
    #allocation2 [shape = 'u8[12288]{0}', space=vmem, size = 0x3000, scoped, tag = 'input window, operand 0, single buffered']
    #allocation3 [shape = 's32[1]{0}', space=sflag, size = 0x4, scoped, tag = 'scoped memory for tpu_custom_call.1']
    #allocation4 [shape = 's32[1]{0}', space=sflag, size = 0x4, scoped, tag = 'scoped memory for tpu_custom_call.1']
    #allocation5 [shape = 'u8[4096]{0}', space=vmem, size = 0x1000, scoped, tag = 'output window, operand 0, single buffered']
    %6 = vsyncpa [#allocation3], 0
    %7 = vsyncpa [#allocation4], 0
    // Predicated region
    $region2: #{tpu_custom_call.1} parent=1 // pred_check
      _
    $region3: #{tpu_custom_call.1} parent=1 // pred_check_branch
      %9 = sbr.rel (0) target = $region5
    $region4: #{tpu_custom_call.1} parent=1 // pred_region
      %s11 = ssub.s32 384, 384
      %12 = vsyncadd [#allocation3], %s11
      %s13 = sshll.u32 [#allocation2], 4
      %s14 = int_to_ptr.vmem [resolvable:$true] %s13
      %19 = dma.hbm_to_vmem [thread:$0]  %s0, 384, %s14, [#allocation3], 128, 128, 8
    $region5: #{tpu_custom_call.1} parent=1 // pred_fallthru
      _
    // Predicated region
    $region6: #{tpu_custom_call.1} parent=1 // pred_check
      _
    $region7: #{tpu_custom_call.1} parent=1 // pred_check_branch
      %21 = sbr.rel (0) target = $region9
    $region8: #{tpu_custom_call.1} parent=1 // pred_region
      %22 = dma.done [#allocation3], 384
    $region9: #{tpu_custom_call.1} parent=1 // pred_fallthru
      _
    %v23 = vld [vmem:[#allocation2] sm:$0xff]
    %s24 = scalar_lea.vmem [#allocation2], 8
    %v25 = vld [vmem:[%s24] sm:$0xff]
    %s26 = scalar_lea.vmem [#allocation2], 16
    %v27 = vld [vmem:[%s26] sm:$0xff]
    %v28 = vsub.f32 %v23, 0.05
    %v29 = vsub.f32 %v25, -0.1
    %v30 = vsub.f32 %v27, 0.15
    %v31 = vand.u32 2147483647, %v28
    %v32 = vand.u32 2147483647, %v29
    %v33 = vand.u32 2147483647, %v30
    %v34 = vmul.f32 %v28, %v28
    %v35 = vmul.f32 %v29, %v29
    %v36 = vadd.f32 %v34, %v35
    %v37 = vmul.f32 %v30, %v30
    %v38 = vadd.f32 %v36, %v37
    %vm39 = vcmp.gt.f32.partialorder %v38, 0.0
    %v40 = vrsqrt.pop %v38
    %v41 = vmul.f32 %v38, %v40
    %v42 = vsel %vm39, %v41, 0.0
    %v43 = vsub.f32 %v42, 0.95
    %v44 = vsub.f32 %v42, 0.9
    %v45 = vsub.f32 0.0, %v44
    %v46 = vsub.f32 %v31, 1.0
    %v47 = vmax.f32 %v46, 0.0
    %v48 = vmul.f32 %v47, %v47
    %v49 = vsub.f32 %v32, 1.0
    %v50 = vmax.f32 %v49, 0.0
    %v51 = vmul.f32 %v50, %v50
    %v52 = vsub.f32 %v27, 0.45000002
    %v53 = vand.u32 2147483647, %v52
    %v54 = vsub.f32 %v53, 0.2
    %v55 = vmax.f32 %v54, 0.0
    %v56 = vmul.f32 %v55, %v55
    %v57 = vadd.f32 %v48, %v51
    %v58 = vadd.f32 %v57, %v56
    %vm59 = vcmp.gt.f32.partialorder %v58, 0.0
    %v60 = vrsqrt.pop %v58
    %v61 = vmul.f32 %v58, %v60
    %v62 = vsel %vm59, %v61, 0.0
    %v63 = vmax.f32 %v46, %v49
    %v64 = vmax.f32 %v63, %v54
    %v65 = vmin.f32 %v64, 0.0
    %v66 = vadd.f32 %v62, %v65
    %v67 = vsub.f32 %v45, %v66
    %v68 = vsub.f32 %v27, -0.15
    %v69 = vand.u32 2147483647, %v68
    %v70 = vsub.f32 %v69, 0.2
    %v71 = vmax.f32 %v70, 0.0
    %v72 = vmul.f32 %v71, %v71
    %v73 = vadd.f32 %v57, %v72
    %vm74 = vcmp.gt.f32.partialorder %v73, 0.0
    %v75 = vrsqrt.pop %v73
    %v76 = vmul.f32 %v73, %v75
    %v77 = vsel %vm74, %v76, 0.0
    %v78 = vmax.f32 %v63, %v70
    %v79 = vmin.f32 %v78, 0.0
    %v80 = vadd.f32 %v77, %v79
    %v81 = vsub.f32 0.0, %v80
    %v82 = vmax.f32 %v67, %v81
    %v83 = vmax.f32 %v43, %v82
    %v84 = vsub.f32 %v31, 0.7
    %v85 = vmax.f32 %v84, 0.0
    %v86 = vmul.f32 %v85, %v85
    %v87 = vsub.f32 %v32, 0.7
    %v88 = vmax.f32 %v87, 0.0
    %v89 = vmul.f32 %v88, %v88
    %v90 = vsub.f32 %v33, 0.7
    %v91 = vmax.f32 %v90, 0.0
    %v92 = vmul.f32 %v91, %v91
    %v93 = vadd.f32 %v86, %v89
    %v94 = vadd.f32 %v93, %v92
    %vm95 = vcmp.gt.f32.partialorder %v94, 0.0
    %v96 = vrsqrt.pop %v94
    %v97 = vmul.f32 %v94, %v96
    %v98 = vsel %vm95, %v97, 0.0
    %v99 = vmax.f32 %v84, %v87
    %v100 = vmax.f32 %v99, %v90
    %v101 = vmin.f32 %v100, 0.0
    %v102 = vadd.f32 %v98, %v101
    %v103 = vsub.f32 %v31, 0.6
    %v104 = vmax.f32 %v103, 0.0
    %v105 = vmul.f32 %v104, %v104
    %v106 = vsub.f32 %v32, 0.6
    %v107 = vmax.f32 %v106, 0.0
    %v108 = vmul.f32 %v107, %v107
    %v109 = vsub.f32 %v33, 0.6
    %v110 = vmax.f32 %v109, 0.0
    %v111 = vmul.f32 %v110, %v110
    %v112 = vadd.f32 %v105, %v108
    %v113 = vadd.f32 %v112, %v111
    %vm114 = vcmp.gt.f32.partialorder %v113, 0.0
    %v115 = vrsqrt.pop %v113
    %v116 = vmul.f32 %v113, %v115
    %v117 = vsel %vm114, %v116, 0.0
    %v118 = vmax.f32 %v103, %v106
    %v119 = vmax.f32 %v118, %v109
    %v120 = vmin.f32 %v119, 0.0
    %v121 = vadd.f32 %v117, %v120
    %v122 = vsub.f32 0.0, %v121
    %v123 = vmax.f32 %v102, %v122
    %v124 = vsub.f32 %v23, 0.75
    %v125 = vand.u32 2147483647, %v124
    %v126 = vsub.f32 %v125, 0.25
    %v127 = vmax.f32 %v126, 0.0
    %v128 = vmul.f32 %v127, %v127
    %v129 = vsub.f32 %v32, 0.25
    %v130 = vmax.f32 %v129, 0.0
    %v131 = vmul.f32 %v130, %v130
    %v132 = vsub.f32 %v33, 0.25
    %v133 = vmax.f32 %v132, 0.0
    %v134 = vmul.f32 %v133, %v133
    %v135 = vadd.f32 %v128, %v131
    %v136 = vadd.f32 %v135, %v134
    %vm137 = vcmp.gt.f32.partialorder %v136, 0.0
    %v138 = vrsqrt.pop %v136
    %v139 = vmul.f32 %v136, %v138
    %v140 = vsel %vm137, %v139, 0.0
    %v141 = vmax.f32 %v126, %v129
    %v142 = vmax.f32 %v141, %v132
    %v143 = vmin.f32 %v142, 0.0
    %v144 = vadd.f32 %v140, %v143
    %v145 = vsub.f32 0.0, %v144
    %v146 = vmax.f32 %v123, %v145
    %v147 = vsub.f32 %v23, -0.65
    %v148 = vand.u32 2147483647, %v147
    %v149 = vsub.f32 %v148, 0.25
    %v150 = vmax.f32 %v149, 0.0
    %v151 = vmul.f32 %v150, %v150
    %v152 = vadd.f32 %v151, %v131
    %v153 = vadd.f32 %v152, %v134
    %vm154 = vcmp.gt.f32.partialorder %v153, 0.0
    %v155 = vrsqrt.pop %v153
    %v156 = vmul.f32 %v153, %v155
    %v157 = vsel %vm154, %v156, 0.0
    %v158 = vmax.f32 %v149, %v129
    %v159 = vmax.f32 %v158, %v132
    %v160 = vmin.f32 %v159, 0.0
    %v161 = vadd.f32 %v157, %v160
    %v162 = vsub.f32 0.0, %v161
    %v163 = vmax.f32 %v146, %v162
    %v164 = vsub.f32 %v31, 0.25
    %v165 = vmax.f32 %v164, 0.0
    %v166 = vmul.f32 %v165, %v165
    %v167 = vsub.f32 %v25, 0.59999996
    %v168 = vand.u32 2147483647, %v167
    %v169 = vsub.f32 %v168, 0.25
    %v170 = vmax.f32 %v169, 0.0
    %v171 = vmul.f32 %v170, %v170
    %v172 = vadd.f32 %v166, %v171
    %v173 = vadd.f32 %v172, %v134
    %vm174 = vcmp.gt.f32.partialorder %v173, 0.0
    %v175 = vrsqrt.pop %v173
    %v176 = vmul.f32 %v173, %v175
    %v177 = vsel %vm174, %v176, 0.0
    %v178 = vmax.f32 %v164, %v169
    %v179 = vmax.f32 %v178, %v132
    %v180 = vmin.f32 %v179, 0.0
    %v181 = vadd.f32 %v177, %v180
    %v182 = vsub.f32 0.0, %v181
    %v183 = vmax.f32 %v163, %v182
    %v184 = vsub.f32 %v25, -0.8
    %v185 = vand.u32 2147483647, %v184
    %v186 = vsub.f32 %v185, 0.25
    %v187 = vmax.f32 %v186, 0.0
    %v188 = vmul.f32 %v187, %v187
    %v189 = vadd.f32 %v166, %v188
    %v190 = vadd.f32 %v189, %v134
    %vm191 = vcmp.gt.f32.partialorder %v190, 0.0
    %v192 = vrsqrt.pop %v190
    %v193 = vmul.f32 %v190, %v192
    %v194 = vsel %vm191, %v193, 0.0
    %v195 = vmax.f32 %v164, %v186
    %v196 = vmax.f32 %v195, %v132
    %v197 = vmin.f32 %v196, 0.0
    %v198 = vadd.f32 %v194, %v197
    %v199 = vsub.f32 0.0, %v198
    %v200 = vmax.f32 %v183, %v199
    %v201 = vsub.f32 %v27, 0.85
    %v202 = vand.u32 2147483647, %v201
    %v203 = vsub.f32 %v202, 0.25
    %v204 = vmax.f32 %v203, 0.0
    %v205 = vmul.f32 %v204, %v204
    %v206 = vadd.f32 %v166, %v131
    %v207 = vadd.f32 %v206, %v205
    %vm208 = vcmp.gt.f32.partialorder %v207, 0.0
    %v209 = vrsqrt.pop %v207
    %v210 = vmul.f32 %v207, %v209
    %v211 = vsel %vm208, %v210, 0.0
    %v212 = vmax.f32 %v164, %v129
    %v213 = vmax.f32 %v212, %v203
    %v214 = vmin.f32 %v213, 0.0
    %v215 = vadd.f32 %v211, %v214
    %v216 = vsub.f32 0.0, %v215
    %v217 = vmax.f32 %v200, %v216
    %v218 = vsub.f32 %v27, -0.54999995
    %v219 = vand.u32 2147483647, %v218
    %v220 = vsub.f32 %v219, 0.25
    %v221 = vmax.f32 %v220, 0.0
    %v222 = vmul.f32 %v221, %v221
    %v223 = vadd.f32 %v206, %v222
    %vm224 = vcmp.gt.f32.partialorder %v223, 0.0
    %v225 = vrsqrt.pop %v223
    %v226 = vmul.f32 %v223, %v225
    %v227 = vsel %vm224, %v226, 0.0
    %v228 = vmax.f32 %v212, %v220
    %v229 = vmin.f32 %v228, 0.0
    %v230 = vadd.f32 %v227, %v229
    %v231 = vsub.f32 0.0, %v230
    %v232 = vmax.f32 %v217, %v231
    %v233 = vmin.f32 %v83, %v232
    %v234 = vsub.f32 %v42, 0.6
    %v235 = vmin.f32 %v233, %v234
    %v236 = vsub.f32 %v42, 0.55
    %v237 = vsub.f32 0.0, %v236
    %v238 = vmax.f32 %v235, %v237
    %v239 = vsub.f32 %v23, 0.5
    %v240 = vand.u32 2147483647, %v239
    %v241 = vsub.f32 %v240, 0.15
    %v242 = vmax.f32 %v241, 0.0
    %v243 = vmul.f32 %v242, %v242
    %v244 = vsub.f32 %v32, 0.175
    %v245 = vmax.f32 %v244, 0.0
    %v246 = vmul.f32 %v245, %v245
    %v247 = vsub.f32 %v33, 0.175
    %v248 = vmax.f32 %v247, 0.0
    %v249 = vmul.f32 %v248, %v248
    %v250 = vadd.f32 %v243, %v246
    %v251 = vadd.f32 %v250, %v249
    %vm252 = vcmp.gt.f32.partialorder %v251, 0.0
    %v253 = vrsqrt.pop %v251
    %v254 = vmul.f32 %v251, %v253
    %v255 = vsel %vm252, %v254, 0.0
    %v256 = vmax.f32 %v241, %v244
    %v257 = vmax.f32 %v256, %v247
    %v258 = vmin.f32 %v257, 0.0
    %v259 = vadd.f32 %v255, %v258
    %v260 = vsub.f32 0.0, %v259
    %v261 = vmax.f32 %v238, %v260
    %v262 = vsub.f32 %v23, -0.39999998
    %v263 = vand.u32 2147483647, %v262
    %v264 = vsub.f32 %v263, 0.15
    %v265 = vmax.f32 %v264, 0.0
    %v266 = vmul.f32 %v265, %v265
    %v267 = vadd.f32 %v266, %v246
    %v268 = vadd.f32 %v267, %v249
    %vm269 = vcmp.gt.f32.partialorder %v268, 0.0
    %v270 = vrsqrt.pop %v268
    %v271 = vmul.f32 %v268, %v270
    %v272 = vsel %vm269, %v271, 0.0
    %v273 = vmax.f32 %v264, %v244
    %v274 = vmax.f32 %v273, %v247
    %v275 = vmin.f32 %v274, 0.0
    %v276 = vadd.f32 %v272, %v275
    %v277 = vsub.f32 0.0, %v276
    %v278 = vmax.f32 %v261, %v277
    %v279 = vsub.f32 %v31, 0.175
    %v280 = vmax.f32 %v279, 0.0
    %v281 = vmul.f32 %v280, %v280
    %v282 = vsub.f32 %v25, 0.35
    %v283 = vand.u32 2147483647, %v282
    %v284 = vsub.f32 %v283, 0.15
    %v285 = vmax.f32 %v284, 0.0
    %v286 = vmul.f32 %v285, %v285
    %v287 = vadd.f32 %v281, %v286
    %v288 = vadd.f32 %v287, %v249
    %vm289 = vcmp.gt.f32.partialorder %v288, 0.0
    %v290 = vrsqrt.pop %v288
    %v291 = vmul.f32 %v288, %v290
    %v292 = vsel %vm289, %v291, 0.0
    %v293 = vmax.f32 %v279, %v284
    %v294 = vmax.f32 %v293, %v247
    %v295 = vmin.f32 %v294, 0.0
    %v296 = vadd.f32 %v292, %v295
    %v297 = vsub.f32 0.0, %v296
    %v298 = vmax.f32 %v278, %v297
    %v299 = vsub.f32 %v25, -0.55
    %v300 = vand.u32 2147483647, %v299
    %v301 = vsub.f32 %v300, 0.15
    %v302 = vmax.f32 %v301, 0.0
    %v303 = vmul.f32 %v302, %v302
    %v304 = vadd.f32 %v281, %v303
    %v305 = vadd.f32 %v304, %v249
    %vm306 = vcmp.gt.f32.partialorder %v305, 0.0
    %v307 = vrsqrt.pop %v305
    %v308 = vmul.f32 %v305, %v307
    %v309 = vsel %vm306, %v308, 0.0
    %v310 = vmax.f32 %v279, %v301
    %v311 = vmax.f32 %v310, %v247
    %v312 = vmin.f32 %v311, 0.0
    %v313 = vadd.f32 %v309, %v312
    %v314 = vsub.f32 0.0, %v313
    %v315 = vmax.f32 %v298, %v314
    %v316 = vsub.f32 %v27, 0.6
    %v317 = vand.u32 2147483647, %v316
    %v318 = vsub.f32 %v317, 0.15
    %v319 = vmax.f32 %v318, 0.0
    %v320 = vmul.f32 %v319, %v319
    %v321 = vadd.f32 %v281, %v246
    %v322 = vadd.f32 %v321, %v320
    %vm323 = vcmp.gt.f32.partialorder %v322, 0.0
    %v324 = vrsqrt.pop %v322
    %v325 = vmul.f32 %v322, %v324
    %v326 = vsel %vm323, %v325, 0.0
    %v327 = vmax.f32 %v279, %v244
    %v328 = vmax.f32 %v327, %v318
    %v329 = vmin.f32 %v328, 0.0
    %v330 = vadd.f32 %v326, %v329
    %v331 = vsub.f32 0.0, %v330
    %v332 = vmax.f32 %v315, %v331
    %v333 = vsub.f32 %v27, -0.29999998
    %v334 = vand.u32 2147483647, %v333
    %v335 = vsub.f32 %v334, 0.15
    %v336 = vmax.f32 %v335, 0.0
    %v337 = vmul.f32 %v336, %v336
    %v338 = vadd.f32 %v321, %v337
    %vm339 = vcmp.gt.f32.partialorder %v338, 0.0
    %v340 = vrsqrt.pop %v338
    %v341 = vmul.f32 %v338, %v340
    %v342 = vsel %vm339, %v341, 0.0
    %v343 = vmax.f32 %v327, %v335
    %v344 = vmin.f32 %v343, 0.0
    %v345 = vadd.f32 %v342, %v344
    %v346 = vsub.f32 0.0, %v345
    %v347 = vmax.f32 %v332, %v346
    %v348 = vsub.f32 %v31, 0.45
    %v349 = vmax.f32 %v348, 0.0
    %v350 = vmul.f32 %v349, %v349
    %v351 = vsub.f32 %v32, 0.45
    %v352 = vmax.f32 %v351, 0.0
    %v353 = vmul.f32 %v352, %v352
    %v354 = vsub.f32 %v33, 0.45
    %v355 = vmax.f32 %v354, 0.0
    %v356 = vmul.f32 %v355, %v355
    %v357 = vadd.f32 %v350, %v353
    %v358 = vadd.f32 %v357, %v356
    %vm359 = vcmp.gt.f32.partialorder %v358, 0.0
    %v360 = vrsqrt.pop %v358
    %v361 = vmul.f32 %v358, %v360
    %v362 = vsel %vm359, %v361, 0.0
    %v363 = vmax.f32 %v348, %v351
    %v364 = vmax.f32 %v363, %v354
    %v365 = vmin.f32 %v364, 0.0
    %v366 = vadd.f32 %v362, %v365
    %v367 = vmin.f32 %v347, %v366
    %368 = vst [vmem:[#allocation5] sm:$0xff] %v367
    // Predicated region
    $region10: #{tpu_custom_call.1} parent=1 // pred_check
      _
    $region11: #{tpu_custom_call.1} parent=1 // pred_check_branch
      %370 = sbr.rel (0) target = $region13
    $region12: #{tpu_custom_call.1} parent=1 // pred_region
      %s372 = ssub.s32 128, 128
      %373 = vsyncadd [#allocation4], %s372
      %s375 = sshll.u32 [#allocation5], 4
      %s376 = int_to_ptr.vmem [resolvable:$true] %s375
      %378 = dma.vmem_to_hbm [thread:$0]  %s376, 128, %s1, [#allocation4]
    $region13: #{tpu_custom_call.1} parent=1 // pred_fallthru
      _
    // Predicated region
    $region14: #{tpu_custom_call.1} parent=1 // pred_check
      _
    $region15: #{tpu_custom_call.1} parent=1 // pred_check_branch
      %380 = sbr.rel (0) target = $region17
    $region16: #{tpu_custom_call.1} parent=1 // pred_region
      %381 = dma.done [#allocation4], 128
    $region17: #{tpu_custom_call.1} parent=1 // pred_fallthru
      _
    %382 = vsyncpa [#allocation3], 1
    %383 = vsyncpa [#allocation4], 1

</llo_original>
